<compile_context>
chip_gen: v5e
topology: v5e:2x2
jax: 0.10.0
libtpu: 0.0.40
codegen_flags: <defaults>
</compile_context>

<pallas_src>
import functools

import jax
import jax.numpy as jnp
from jax.experimental import pallas as pl
from jax.experimental.pallas import tpu as pltpu


# ----------------------------------------------------------------------------
# Kernel
# ----------------------------------------------------------------------------
def critic_fused_kernel(s_ref, a_ref,
                        w1s_ref, w1a_ref, b1_ref,
                        w2_ref, b2_ref,
                        wo_ref, bo_ref,
                        out_ref):
    # Layer 1: split-K over state/action instead of a wrapper-side concat.
    h = jnp.dot(s_ref[...], w1s_ref[...], preferred_element_type=jnp.float32)
    h = h + jnp.dot(a_ref[...], w1a_ref[...], preferred_element_type=jnp.float32)
    h = jnp.maximum(h + b1_ref[...], 0.0)                      # [T, H1] f32

    # Layer 2: block-diagonal fused weight keeps the heads independent.
    # (cast to the weight dtype: no-op in f32 mode, bf16 MXU inputs otherwise)
    h = jnp.dot(h.astype(w2_ref.dtype), w2_ref[...],
                preferred_element_type=jnp.float32) + b2_ref[...]
    h = jnp.maximum(h, 0.0)                                     # [T, H2] f32

    # Output layer: one [H2, 2] matmul -> [T, 2] (col 0 = q1, col 1 = q2).
    q = jnp.dot(h.astype(wo_ref.dtype), wo_ref[...],
                preferred_element_type=jnp.float32) + bo_ref[...]
    out_ref[...] = q.astype(out_ref.dtype)


# ----------------------------------------------------------------------------
# Helpers
# ----------------------------------------------------------------------------
def _round_up(x, m):
    return ((x + m - 1) // m) * m


def _choose_tile_b(B, max_tile_b):
    """Batch tile: multiple of 8 (sublane), as large as possible, but with
    >= 2 grid steps once there is enough work (so both v7x TCs get a share)."""
    max_tile_b = max(8, _round_up(max_tile_b, 8))
    if B <= 256:
        # Latency-bound small-batch regime: one grid step.
        return min(_round_up(B, 8), max_tile_b)
    two_step = _round_up((B + 1) // 2, 8)
    return min(max_tile_b, two_step)


# ----------------------------------------------------------------------------
# Wrapper
# ----------------------------------------------------------------------------
@functools.partial(jax.jit, static_argnames=("max_tile_b", "use_bf16"))
def critic_forward(state, action, fused, *, max_tile_b=2048, use_bf16=False):
    """Twin-Q forward. state: [B, S], action: [B, A] (or [B]).

    `fused` is the output of `fuse_critic_params` (built once, not per step).
    Returns (q1, q2), each [B, 1], matching the PyTorch module.
    Set use_bf16=True for large-B throughput (HBM-bound regime, esp. v5e);
    accumulation stays f32 but results are no longer bit-exact vs f32.
    """
    if action.ndim == 1:
        action = action[:, None]
    state = state.astype(jnp.float32)
    action = action.astype(jnp.float32)

    B, S = state.shape
    A = action.shape[1]
    w1s, w1a, b1 = fused["w1s"], fused["w1a"], fused["b1"]
    w2, b2, wo, bo = fused["w2"], fused["b2"], fused["wo"], fused["bo"]
    H1 = w1s.shape[1]   # padded 2*h0 (multiple of 128)
    H2 = w2.shape[1]    # padded 2*h1 (multiple of 128)

    if use_bf16:
        state = state.astype(jnp.bfloat16)
        action = action.astype(jnp.bfloat16)
        w1s = w1s.astype(jnp.bfloat16)
        w1a = w1a.astype(jnp.bfloat16)
        w2 = w2.astype(jnp.bfloat16)
        wo = wo.astype(jnp.bfloat16)

    tb = _choose_tile_b(B, max_tile_b)
    # No wrapper-side padding: ragged tail block handled by Pallas boundary
    # masking (compute is row-local, OOB rows never contaminate valid rows).
    grid = (pl.cdiv(B, tb),)

    const = lambda i: (0, 0)         # weights/biases: resident across the grid
    batch = lambda i: (i, 0)         # activations/outputs: tiled over batch

    # Advisory cost: FLOPs the MXU actually executes (it does not skip the
    # zero blocks of the padded / block-diagonal weights).
    flops = 2 * B * (S * H1 + A * H1 + H1 * H2 + H2 * 2)
    act_bytes = 2 if use_bf16 else 4
    bytes_accessed = (
        act_bytes * B * (S + A)
        + 4 * B * 2
        + act_bytes * (w1s.size + w1a.size + w2.size + wo.size)
        + 4 * (b1.size + b2.size + bo.size))

    out = pl.pallas_call(
        critic_fused_kernel,
        out_shape=jax.ShapeDtypeStruct((B, 2), jnp.float32),
        grid=grid,
        in_specs=[
            pl.BlockSpec((tb, S), batch),          # state tile
            pl.BlockSpec((tb, A), batch),          # action tile
            pl.BlockSpec((S, H1), const),          # W1_state
            pl.BlockSpec((A, H1), const),          # W1_action
            pl.BlockSpec((1, H1), const),          # b1 (packed, f32)
            pl.BlockSpec((H1, H2), const),         # W2 (block-diag, padded)
            pl.BlockSpec((1, H2), const),          # b2 (packed, f32)
            pl.BlockSpec((H2, 2), const),          # Wo (block-diag columns)
            pl.BlockSpec((1, 2), const),           # bo (packed, f32)
        ],
        out_specs=pl.BlockSpec((tb, 2), batch),
        compiler_params=pltpu.CompilerParams(
            dimension_semantics=("parallel",)),
        cost_estimate=pl.CostEstimate(
            flops=int(flops), transcendentals=0,
            bytes_accessed=int(bytes_accessed)),
    )(state, action, w1s, w1a, b1, w2, b2, wo, bo)

    return out[:, 0:1], out[:, 1:2]


# ----------------------------------------------------------------------------
# Parameter construction / fusion
# ----------------------------------------------------------------------------
def init_critic_params(key, state_dim, action_dim, n_hidden_units):
    """Deterministic init mirroring torch.nn.Linear default (uniform +-1/sqrt(fan_in)).
    Weights stored as [in, out] (transposed vs torch)."""
    dims_in = state_dim + action_dim
    h0, h1 = n_hidden_units

    def linear(k, fan_in, fan_out):
        kw, kb = jax.random.split(k)
        bound = 1.0 / jnp.sqrt(jnp.float32(fan_in))
        w = jax.random.uniform(kw, (fan_in, fan_out), jnp.float32, -bound, bound)
        b = jax.random.uniform(kb, (1, fan_out), jnp.float32, -bound, bound)
        return w, b

    keys = jax.random.split(key, 6)
    p = {}
    p["q1_w1"], p["q1_b1"] = linear(keys[0], dims_in, h0)
    p["q1_w2"], p["q1_b2"] = linear(keys[1], h0, h1)
    p["q1_wo"], p["q1_bo"] = linear(keys[2], h1, 1)
    p["q2_w1"], p["q2_b1"] = linear(keys[3], dims_in, h0)
    p["q2_w2"], p["q2_b2"] = linear(keys[4], h0, h1)
    p["q2_wo"], p["q2_bo"] = linear(keys[5], h1, 1)
    return p


def fuse_critic_params(params, state_dim, *, lane=128):
    """Fuse the two Q heads into wide / block-diagonal matrices (done once).

    Hidden widths are zero-padded up to a multiple of `lane` (=128) so the
    kernel's intermediates use full vregs. The extra zero columns/rows are
    mathematically inert: zero bias -> ReLU(0)=0 -> multiplied by zero rows.
    """
    in_dim, h0 = params["q1_w1"].shape
    h1 = params["q1_w2"].shape[1]
    H1 = _round_up(2 * h0, lane)
    H2 = _round_up(2 * h1, lane)

    w1 = jnp.zeros((in_dim, H1), jnp.float32)
    w1 = w1.at[:, :h0].set(params["q1_w1"]).at[:, h0:2 * h0].set(params["q2_w1"])
    b1 = jnp.zeros((1, H1), jnp.float32)
    b1 = b1.at[:, :h0].set(params["q1_b1"]).at[:, h0:2 * h0].set(params["q2_b1"])

    w2 = jnp.zeros((H1, H2), jnp.float32)
    w2 = w2.at[:h0, :h1].set(params["q1_w2"]).at[h0:2 * h0, h1:2 * h1].set(params["q2_w2"])
    b2 = jnp.zeros((1, H2), jnp.float32)
    b2 = b2.at[:, :h1].set(params["q1_b2"]).at[:, h1:2 * h1].set(params["q2_b2"])

    wo = jnp.zeros((H2, 2), jnp.float32)
    wo = wo.at[:h1, 0:1].set(params["q1_wo"]).at[h1:2 * h1, 1:2].set(params["q2_wo"])
    bo = jnp.concatenate([params["q1_bo"], params["q2_bo"]], axis=1)   # [1, 2]

    return {
        "w1s": w1[:state_dim],   # [S, H1]
        "w1a": w1[state_dim:],   # [A, H1]
        "b1": b1, "w2": w2, "b2": b2, "wo": wo, "bo": bo,
    }


# ----------------------------------------------------------------------------
# Pure-JAX reference (semantically identical to the PyTorch forward)
# ----------------------------------------------------------------------------
def critic_forward_ref(state, action, params):
    if action.ndim == 1:
        action = action[:, None]
    sa = jnp.concatenate([state, action], axis=1).astype(jnp.float32)

    def head(prefix):
        h = jnp.maximum(sa @ params[f"{prefix}_w1"] + params[f"{prefix}_b1"], 0.0)
        h = jnp.maximum(h @ params[f"{prefix}_w2"] + params[f"{prefix}_b2"], 0.0)
        return h @ params[f"{prefix}_wo"] + params[f"{prefix}_bo"]

    return head("q1"), head("q2")


# TODO(synk): checkpoint save/load from the PyTorch module is file I/O with no
# Pallas equivalent; only the forward pass is implemented here.

if __name__ == "__main__":
    key = jax.random.PRNGKey(0)
    k_param, k_state, k_action = jax.random.split(key, 3)

    # Small shapes consistent with the module's forward.
    batch = 8
    state_dim = 16
    action_dim = 4
    n_hidden_units = (32, 32)

    params = init_critic_params(k_param, state_dim, action_dim, n_hidden_units)
    fused = fuse_critic_params(params, state_dim)
    state = jax.random.normal(k_state, (batch, state_dim), jnp.float32)
    action = jax.random.normal(k_action, (batch, action_dim), jnp.float32)

    q1, q2 = critic_forward(state, action, fused)
    q1 = jax.block_until_ready(q1)
    q2 = jax.block_until_ready(q2)

    q1_ref, q2_ref = critic_forward_ref(state, action, params)
    assert q1.shape == (batch, 1) and q2.shape == (batch, 1)
    assert jnp.allclose(q1, q1_ref, atol=1e-5, rtol=1e-5)
    assert jnp.allclose(q2, q2_ref, atol=1e-5, rtol=1e-5)

    # Ragged batch (B % 8 != 0): exercises Pallas boundary-block masking,
    # i.e. the no-wrapper-pad path flagged in the perf review.
    rb = 5
    rq1, rq2 = critic_forward(state[:rb], action[:rb], fused)
    rq1 = jax.block_until_ready(rq1)
    rq2 = jax.block_until_ready(rq2)
    assert rq1.shape == (rb, 1) and rq2.shape == (rb, 1)
    assert jnp.allclose(rq1, q1_ref[:rb], atol=1e-5, rtol=1e-5)
    assert jnp.allclose(rq2, q2_ref[:rb], atol=1e-5, rtol=1e-5)

    print("KERNEL_OK")
</pallas_src>

<mosaic_0001>
module attributes {stable_mosaic.version = 11 : i64} {
  func.func @critic_fused_kernel(%arg0: i32, %arg1: memref<8x16xf32, #tpu.memory_space<vmem>>, %arg2: memref<8x4xf32, #tpu.memory_space<vmem>>, %arg3: memref<16x128xf32, #tpu.memory_space<vmem>>, %arg4: memref<4x128xf32, #tpu.memory_space<vmem>>, %arg5: memref<1x128xf32, #tpu.memory_space<vmem>>, %arg6: memref<128x128xf32, #tpu.memory_space<vmem>>, %arg7: memref<1x128xf32, #tpu.memory_space<vmem>>, %arg8: memref<128x2xf32, #tpu.memory_space<vmem>>, %arg9: memref<1x2xf32, #tpu.memory_space<vmem>>, %arg10: memref<8x2xf32, #tpu.memory_space<vmem>>) attributes {dimension_semantics = [#tpu.dimension_semantics<parallel>], iteration_bounds = array<i64: 1>, scalar_prefetch = 0 : i64, scratch_operands = 0 : i64, tpu.core_type = #tpu.core_type<tc>, window_params = [{transform_indices = @transform_0, window_bounds = array<i64: 8, 16>}, {transform_indices = @transform_1, window_bounds = array<i64: 8, 4>}, {pipeline_mode = #tpu.pipeline_mode<synchronous>, transform_indices = @transform_2, window_bounds = array<i64: 16, 128>}, {pipeline_mode = #tpu.pipeline_mode<synchronous>, transform_indices = @transform_3, window_bounds = array<i64: 4, 128>}, {pipeline_mode = #tpu.pipeline_mode<synchronous>, transform_indices = @transform_4, window_bounds = array<i64: 1, 128>}, {pipeline_mode = #tpu.pipeline_mode<synchronous>, transform_indices = @transform_5, window_bounds = array<i64: 128, 128>}, {pipeline_mode = #tpu.pipeline_mode<synchronous>, transform_indices = @transform_6, window_bounds = array<i64: 1, 128>}, {pipeline_mode = #tpu.pipeline_mode<synchronous>, transform_indices = @transform_7, window_bounds = array<i64: 128, 2>}, {pipeline_mode = #tpu.pipeline_mode<synchronous>, transform_indices = @transform_8, window_bounds = array<i64: 1, 2>}, {transform_indices = @transform_9, window_bounds = array<i64: 8, 2>}]} {
    %c0 = arith.constant 0 : index
    %c0_0 = arith.constant 0 : index
    %0 = vector.load %arg1[%c0, %c0_0] : memref<8x16xf32, #tpu.memory_space<vmem>>, vector<8x16xf32>
    %c0_1 = arith.constant 0 : index
    %c0_2 = arith.constant 0 : index
    %1 = vector.load %arg3[%c0_1, %c0_2] : memref<16x128xf32, #tpu.memory_space<vmem>>, vector<16x128xf32>
    %cst = arith.constant dense<0.000000e+00> : vector<8x128xf32>
    %2 = tpu.matmul %0, %1, %cst {dimension_numbers = #tpu.dot_dimension_numbers<[1], [0], [0], [1], [0, 0, 1, 1], [], []>} : vector<8x16xf32>, vector<16x128xf32>, vector<8x128xf32> -> vector<8x128xf32>
    %c0_3 = arith.constant 0 : index
    %c0_4 = arith.constant 0 : index
    %3 = vector.load %arg2[%c0_3, %c0_4] : memref<8x4xf32, #tpu.memory_space<vmem>>, vector<8x4xf32>
    %c0_5 = arith.constant 0 : index
    %c0_6 = arith.constant 0 : index
    %4 = vector.load %arg4[%c0_5, %c0_6] : memref<4x128xf32, #tpu.memory_space<vmem>>, vector<4x128xf32>
    %cst_7 = arith.constant dense<0.000000e+00> : vector<8x128xf32>
    %5 = tpu.matmul %3, %4, %cst_7 {dimension_numbers = #tpu.dot_dimension_numbers<[1], [0], [0], [1], [0, 0, 1, 1], [], []>} : vector<8x4xf32>, vector<4x128xf32>, vector<8x128xf32> -> vector<8x128xf32>
    %6 = arith.addf %2, %5 : vector<8x128xf32>
    %c0_8 = arith.constant 0 : index
    %c0_9 = arith.constant 0 : index
    %7 = vector.load %arg5[%c0_8, %c0_9] : memref<1x128xf32, #tpu.memory_space<vmem>>, vector<1x128xf32>
    %8 = vector.broadcast %7 : vector<1x128xf32> to vector<8x128xf32>
    %9 = arith.addf %6, %8 : vector<8x128xf32>
    %cst_10 = arith.constant 0.000000e+00 : f32
    %10 = vector.broadcast %cst_10 : f32 to vector<8x128xf32>
    %11 = arith.maximumf %9, %10 : vector<8x128xf32>
    %c0_11 = arith.constant 0 : index
    %c0_12 = arith.constant 0 : index
    %12 = vector.load %arg6[%c0_11, %c0_12] : memref<128x128xf32, #tpu.memory_space<vmem>>, vector<128x128xf32>
    %cst_13 = arith.constant dense<0.000000e+00> : vector<8x128xf32>
    %13 = tpu.matmul %11, %12, %cst_13 {dimension_numbers = #tpu.dot_dimension_numbers<[1], [0], [0], [1], [0, 0, 1, 1], [], []>} : vector<8x128xf32>, vector<128x128xf32>, vector<8x128xf32> -> vector<8x128xf32>
    %c0_14 = arith.constant 0 : index
    %c0_15 = arith.constant 0 : index
    %14 = vector.load %arg7[%c0_14, %c0_15] : memref<1x128xf32, #tpu.memory_space<vmem>>, vector<1x128xf32>
    %15 = vector.broadcast %14 : vector<1x128xf32> to vector<8x128xf32>
    %16 = arith.addf %13, %15 : vector<8x128xf32>
    %cst_16 = arith.constant 0.000000e+00 : f32
    %17 = vector.broadcast %cst_16 : f32 to vector<8x128xf32>
    %18 = arith.maximumf %16, %17 : vector<8x128xf32>
    %c0_17 = arith.constant 0 : index
    %c0_18 = arith.constant 0 : index
    %19 = vector.load %arg8[%c0_17, %c0_18] : memref<128x2xf32, #tpu.memory_space<vmem>>, vector<128x2xf32>
    %cst_19 = arith.constant dense<0.000000e+00> : vector<8x2xf32>
    %20 = tpu.matmul %18, %19, %cst_19 {dimension_numbers = #tpu.dot_dimension_numbers<[1], [0], [0], [1], [0, 0, 1, 1], [], []>} : vector<8x128xf32>, vector<128x2xf32>, vector<8x2xf32> -> vector<8x2xf32>
    %c0_20 = arith.constant 0 : index
    %c0_21 = arith.constant 0 : index
    %21 = vector.load %arg9[%c0_20, %c0_21] : memref<1x2xf32, #tpu.memory_space<vmem>>, vector<1x2xf32>
    %22 = vector.broadcast %21 : vector<1x2xf32> to vector<8x2xf32>
    %23 = arith.addf %20, %22 : vector<8x2xf32>
    %c0_22 = arith.constant 0 : index
    %c0_23 = arith.constant 0 : index
    %24 = vector.load %arg10[%c0_22, %c0_23] : memref<8x2xf32, #tpu.memory_space<vmem>>, vector<8x2xf32>
    tpu.vector_store %arg10[%c0_22, %c0_23], %23 {strides = array<i32>} : memref<8x2xf32, #tpu.memory_space<vmem>>, vector<8x2xf32>,
    return
  }
  func.func @transform_0(%arg0: i32) -> (i32, i32) {
    %c0_i32 = arith.constant 0 : i32
    %c0_i32_0 = arith.constant 0 : i32
    return %arg0, %c0_i32 : i32, i32
  }
  func.func @transform_1(%arg0: i32) -> (i32, i32) {
    %c0_i32 = arith.constant 0 : i32
    %c0_i32_0 = arith.constant 0 : i32
    return %arg0, %c0_i32 : i32, i32
  }
  func.func @transform_2(%arg0: i32) -> (i32, i32) {
    %c0_i32 = arith.constant 0 : i32
    %c0_i32_0 = arith.constant 0 : i32
    %c0_i32_1 = arith.constant 0 : i32
    return %c0_i32, %c0_i32_0 : i32, i32
  }
  func.func @transform_3(%arg0: i32) -> (i32, i32) {
    %c0_i32 = arith.constant 0 : i32
    %c0_i32_0 = arith.constant 0 : i32
    %c0_i32_1 = arith.constant 0 : i32
    return %c0_i32, %c0_i32_0 : i32, i32
  }
  func.func @transform_4(%arg0: i32) -> (i32, i32) {
    %c0_i32 = arith.constant 0 : i32
    %c0_i32_0 = arith.constant 0 : i32
    %c0_i32_1 = arith.constant 0 : i32
    return %c0_i32, %c0_i32_0 : i32, i32
  }
  func.func @transform_5(%arg0: i32) -> (i32, i32) {
    %c0_i32 = arith.constant 0 : i32
    %c0_i32_0 = arith.constant 0 : i32
    %c0_i32_1 = arith.constant 0 : i32
    return %c0_i32, %c0_i32_0 : i32, i32
  }
  func.func @transform_6(%arg0: i32) -> (i32, i32) {
    %c0_i32 = arith.constant 0 : i32
    %c0_i32_0 = arith.constant 0 : i32
    %c0_i32_1 = arith.constant 0 : i32
    return %c0_i32, %c0_i32_0 : i32, i32
  }
  func.func @transform_7(%arg0: i32) -> (i32, i32) {
    %c0_i32 = arith.constant 0 : i32
    %c0_i32_0 = arith.constant 0 : i32
    %c0_i32_1 = arith.constant 0 : i32
    return %c0_i32, %c0_i32_0 : i32, i32
  }
  func.func @transform_8(%arg0: i32) -> (i32, i32) {
    %c0_i32 = arith.constant 0 : i32
    %c0_i32_0 = arith.constant 0 : i32
    %c0_i32_1 = arith.constant 0 : i32
    return %c0_i32, %c0_i32_0 : i32, i32
  }
  func.func @transform_9(%arg0: i32) -> (i32, i32) {
    %c0_i32 = arith.constant 0 : i32
    %c0_i32_0 = arith.constant 0 : i32
    return %arg0, %c0_i32 : i32, i32
  }
}

</mosaic_0001>

<llo_original>
// kernel: critic_forward.1
$region0: #{critic_forward.1}
  #allocation0 [shape = 'u32[]', space=smem, size = 0x4, offset = 0x4, fixed_abs, tag = 'smem constant byte address 0x4 - core index']
  #allocation1 [shape = 'u32[72,128]{1,0:T(1,128)}', space=vmem, size = 0x9000, scoped, tag = 'internal scratch']
  %s0 = inlined_call_operand.hbm [shape: f32[8,16], index: 0, kind: input, shape index: {}]
  %s1 = inlined_call_operand.vmem [shape: f32[8,4], index: 1, kind: input, shape index: {}]
  %s2 = inlined_call_operand.vmem [shape: f32[16,128], index: 2, kind: input, shape index: {}]
  %s3 = inlined_call_operand.vmem [shape: f32[4,128], index: 3, kind: input, shape index: {}]
  %s4 = inlined_call_operand.hbm [shape: f32[1,128], index: 4, kind: input, shape index: {}]
  %s5 = inlined_call_operand.vmem [shape: f32[128,128], index: 5, kind: input, shape index: {}]
  %s6 = inlined_call_operand.hbm [shape: f32[1,128], index: 6, kind: input, shape index: {}]
  %s7 = inlined_call_operand.vmem [shape: f32[128,2], index: 7, kind: input, shape index: {}]
  %s8 = inlined_call_operand.hbm [shape: f32[1,2], index: 8, kind: input, shape index: {}]
  %s9 = inlined_call_operand.vmem [shape: f32[8,2], index: 9, kind: output, shape index: {}]
  %s10 = sld [smem:[#allocation0]]
  $region62: #{critic_forward.1} parent=0
    _
  %s12 = ssub.s32 1, %s10
  %s13 = scalar_select 0, %s12, %s10
  $region1: #{critic_forward.1} parent=0
    #allocation2 [shape = 'u8[4096]{0}', space=vmem, size = 0x1000, scoped, tag = 'input window, operand 0, single buffered']
    #allocation3 [shape = 's32[1]{0}', space=sflag, size = 0x4, scoped, tag = 'scoped memory for critic_forward.1']
    #allocation4 [shape = 'u8[512]{0}', space=vmem, size = 0x400, scoped, tag = 'input window, operand 4, single buffered']
    #allocation5 [shape = 's32[1]{0}', space=sflag, size = 0x4, scoped, tag = 'scoped memory for critic_forward.1']
    #allocation6 [shape = 'u8[512]{0}', space=vmem, size = 0x400, scoped, tag = 'input window, operand 6, single buffered']
    #allocation7 [shape = 'u8[512]{0}', space=vmem, size = 0x400, scoped, tag = 'input window, operand 8, single buffered']
    #allocation8 [shape = 's32[1]{0}', space=sflag, size = 0x4, scoped, tag = 'scoped memory for critic_forward.1']
    %14 = vsyncpa [#allocation3], 0
    %15 = vsyncpa [#allocation5], 0
    %16 = vsyncpa [#allocation8], 0
    // Predicated region
    $region2: #{critic_forward.1} parent=1 // pred_check
      _
    $region3: #{critic_forward.1} parent=1 // pred_check_branch
      %18 = sbr.rel (0) target = $region5
    $region4: #{critic_forward.1} parent=1 // pred_region
      %20 = vsyncadd [#allocation3], 0
      %s22 = sshll.u32 %s0, 4
      %s23 = int_to_ptr.hbm [resolvable:$true] %s22
      %s24 = sshll.u32 [#allocation2], 4
      %s25 = int_to_ptr.vmem [resolvable:$true] %s24
      %27 = dma.hbm_to_vmem [thread:$0]  %s23, 128, %s25, [#allocation3]
    $region5: #{critic_forward.1} parent=1 // pred_fallthru
      _
    // Predicated region
    $region6: #{critic_forward.1} parent=1 // pred_check
      _
    $region7: #{critic_forward.1} parent=1 // pred_check_branch
      %29 = sbr.rel (0) target = $region9
    $region8: #{critic_forward.1} parent=1 // pred_region
      _
    $region9: #{critic_forward.1} parent=1 // pred_fallthru
      _
    // Predicated region
    $region10: #{critic_forward.1} parent=1 // pred_check
      _
    $region11: #{critic_forward.1} parent=1 // pred_check_branch
      %31 = sbr.rel (0) target = $region13
    $region12: #{critic_forward.1} parent=1 // pred_region
      _
    $region13: #{critic_forward.1} parent=1 // pred_fallthru
      _
    // Predicated region
    $region14: #{critic_forward.1} parent=1 // pred_check
      _
    $region15: #{critic_forward.1} parent=1 // pred_check_branch
      %33 = sbr.rel (0) target = $region17
    $region16: #{critic_forward.1} parent=1 // pred_region
      _
    $region17: #{critic_forward.1} parent=1 // pred_fallthru
      _
    // Predicated region
    $region18: #{critic_forward.1} parent=1 // pred_check
      _
    $region19: #{critic_forward.1} parent=1 // pred_check_branch
      %35 = sbr.rel (0) target = $region21
    $region20: #{critic_forward.1} parent=1 // pred_region
      %37 = vsyncadd [#allocation5], 0
      %s39 = sshll.u32 %s4, 4
      %s40 = int_to_ptr.hbm [resolvable:$true] %s39
      %s41 = sshll.u32 [#allocation4], 4
      %s42 = int_to_ptr.vmem [resolvable:$true] %s41
      %44 = dma.hbm_to_vmem [thread:$0]  %s40, 16, %s42, [#allocation5]
    $region21: #{critic_forward.1} parent=1 // pred_fallthru
      _
    // Predicated region
    $region22: #{critic_forward.1} parent=1 // pred_check
      _
    $region23: #{critic_forward.1} parent=1 // pred_check_branch
      %46 = sbr.rel (0) target = $region25
    $region24: #{critic_forward.1} parent=1 // pred_region
      _
    $region25: #{critic_forward.1} parent=1 // pred_fallthru
      _
    // Predicated region
    $region26: #{critic_forward.1} parent=1 // pred_check
      _
    $region27: #{critic_forward.1} parent=1 // pred_check_branch
      %48 = sbr.rel (0) target = $region29
    $region28: #{critic_forward.1} parent=1 // pred_region
      %50 = vsyncadd [#allocation5], 0
      %s52 = sshll.u32 %s6, 4
      %s53 = int_to_ptr.hbm [resolvable:$true] %s52
      %s54 = sshll.u32 [#allocation6], 4
      %s55 = int_to_ptr.vmem [resolvable:$true] %s54
      %57 = dma.hbm_to_vmem [thread:$0]  %s53, 16, %s55, [#allocation5]
    $region29: #{critic_forward.1} parent=1 // pred_fallthru
      _
    // Predicated region
    $region30: #{critic_forward.1} parent=1 // pred_check
      _
    $region31: #{critic_forward.1} parent=1 // pred_check_branch
      %59 = sbr.rel (0) target = $region33
    $region32: #{critic_forward.1} parent=1 // pred_region
      _
    $region33: #{critic_forward.1} parent=1 // pred_fallthru
      _
    // Predicated region
    $region34: #{critic_forward.1} parent=1 // pred_check
      _
    $region35: #{critic_forward.1} parent=1 // pred_check_branch
      %61 = sbr.rel (0) target = $region37
    $region36: #{critic_forward.1} parent=1 // pred_region
      %63 = vsyncadd [#allocation8], 0
      %s65 = sshll.u32 %s8, 4
      %s66 = int_to_ptr.hbm [resolvable:$true] %s65
      %s67 = sshll.u32 [#allocation7], 4
      %s68 = int_to_ptr.vmem [resolvable:$true] %s67
      %70 = dma.hbm_to_vmem [thread:$0]  %s66, 16, %s68, [#allocation8]
    $region37: #{critic_forward.1} parent=1 // pred_fallthru
      _
    // Predicated region
    $region38: #{critic_forward.1} parent=1 // pred_check
      _
    $region39: #{critic_forward.1} parent=1 // pred_check_branch
      %72 = sbr.rel (0) target = $region41
    $region40: #{critic_forward.1} parent=1 // pred_region
      %74 = dma.done [#allocation3], 128
    $region41: #{critic_forward.1} parent=1 // pred_fallthru
      _
    // Predicated region
    $region42: #{critic_forward.1} parent=1 // pred_check
      _
    $region43: #{critic_forward.1} parent=1 // pred_check_branch
      %76 = sbr.rel (0) target = $region45
    $region44: #{critic_forward.1} parent=1 // pred_region
      %78 = dma.done [#allocation5], 16
    $region45: #{critic_forward.1} parent=1 // pred_fallthru
      _
    // Predicated region
    $region46: #{critic_forward.1} parent=1 // pred_check
      _
    $region47: #{critic_forward.1} parent=1 // pred_check_branch
      %80 = sbr.rel (0) target = $region49
    $region48: #{critic_forward.1} parent=1 // pred_region
      %82 = dma.done [#allocation5], 16
    $region49: #{critic_forward.1} parent=1 // pred_fallthru
      _
    // Predicated region
    $region50: #{critic_forward.1} parent=1 // pred_check
      _
    $region51: #{critic_forward.1} parent=1 // pred_check_branch
      %84 = sbr.rel (0) target = $region53
    $region52: #{critic_forward.1} parent=1 // pred_region
      %86 = dma.done [#allocation8], 16
    $region53: #{critic_forward.1} parent=1 // pred_fallthru
      _
    %v87 = vld [vmem:[#allocation2] sm:$0xff]
    %v88 = vld [vmem:[%s2] sm:$0xff]
    %v89 = vld [vmem:[%s2 + $0x8] sm:$0xff]
    %v90 = vld [vmem:[%s1] sm:$0xff]
    %v91 = vld [vmem:[%s3] sm:$0xf]
    %vm92 = vcmask 31744
    %v94 = vsel %vm92, %v90, 0
    %vm96 = vcmask 1043456
    %v98 = vsel %vm96, %v91, 0
    %100 = vmatpush.msra.mxu0 0.0
    %101 = vmatpush.msra.mxu0 0.0
    %102 = vmatpush.msra.mxu0 0.0
    %103 = vmatpush.msra.mxu0 0.0
    %104 = vmatpush.msra.mxu0 0.0
    %105 = vmatpush.msra.mxu0 0.0
    %106 = vmatpush.msra.mxu0 0.0
    %107 = vmatpush.msra.mxu0 0.0
    %108 = vmatpush.msra.mxu0 0.0
    %109 = vmatpush.msra.mxu0 0.0
    %110 = vmatpush.msra.mxu0 0.0
    %111 = vmatpush.msra.mxu0 0.0
    %112 = vmatpush.msra.mxu0 0.0
    %113 = vmatpush.msra.mxu0 0.0
    %114 = vmatpush.msra.mxu0 0.0
    %115 = vmatpush.msra.mxu0 %v98
    %116 = vmatmul.f32.gmra.mxu0 %v94
    %v117 = vpop.f32.mrf.mxu0
    %v118 = vadd.f32 0.0, %v117
    %119 = vdwg.mxu0
    %vm120 = vcmask 130048
    %v122 = vsel %vm120, %v87, 0
    %124 = vmatpush.msra.mxu0 0.0
    %125 = vmatpush.msra.mxu0 0.0
    %126 = vmatpush.msra.mxu0 0.0
    %127 = vmatpush.msra.mxu0 0.0
    %128 = vmatpush.msra.mxu0 0.0
    %129 = vmatpush.msra.mxu0 0.0
    %130 = vmatpush.msra.mxu0 0.0
    %131 = vmatpush.msra.mxu0 0.0
    %132 = vmatpush.msra.mxu0 0.0
    %133 = vmatpush.msra.mxu0 0.0
    %134 = vmatpush.msra.mxu0 0.0
    %135 = vmatpush.msra.mxu0 0.0
    %136 = vmatpush.msra.mxu0 0.0
    %137 = vmatpush.msra.mxu0 0.0
    %138 = vmatpush.msra.mxu0 %v89
    %139 = vmatpush.msra.mxu0 %v88
    %140 = vmatmul.f32.gmra.mxu0 %v122
    %v141 = vpop.f32.mrf.mxu0
    %v142 = vadd.f32 %v118, %v141
    %143 = vdwg.mxu0
    %v144 = vld [vmem:[#allocation4] sm:$0x1]
    %v146 = vperm.slane %v144, 0
    %v148 = vadd.f32 %v142, %v146
    %v149 = vmax.f32 %v148, 0.0
    %v150 = vld [vmem:[%s5] sm:$0xff]
    %v151 = vld [vmem:[%s5 + $0x8] sm:$0xff]
    %v152 = vld [vmem:[%s5 + $0x10] sm:$0xff]
    %v153 = vld [vmem:[%s5 + $0x18] sm:$0xff]
    %v154 = vld [vmem:[%s5 + $0x20] sm:$0xff]
    %v155 = vld [vmem:[%s5 + $0x28] sm:$0xff]
    %v156 = vld [vmem:[%s5 + $0x30] sm:$0xff]
    %v157 = vld [vmem:[%s5 + $0x38] sm:$0xff]
    %v158 = vld [vmem:[%s5 + $0x40] sm:$0xff]
    %v159 = vld [vmem:[%s5 + $0x48] sm:$0xff]
    %v160 = vld [vmem:[%s5 + $0x50] sm:$0xff]
    %v161 = vld [vmem:[%s5 + $0x58] sm:$0xff]
    %v162 = vld [vmem:[%s5 + $0x60] sm:$0xff]
    %v163 = vld [vmem:[%s5 + $0x68] sm:$0xff]
    %v164 = vld [vmem:[%s5 + $0x70] sm:$0xff]
    %v165 = vld [vmem:[%s5 + $0x78] sm:$0xff]
    %v166 = vld [vmem:[#allocation6] sm:$0x1]
    %v168 = vperm.slane %v166, 0
    %170 = vmatpush.msra.mxu0 %v165
    %171 = vmatpush.msra.mxu0 %v164
    %172 = vmatpush.msra.mxu0 %v163
    %173 = vmatpush.msra.mxu0 %v162
    %174 = vmatpush.msra.mxu0 %v161
    %175 = vmatpush.msra.mxu0 %v160
    %176 = vmatpush.msra.mxu0 %v159
    %177 = vmatpush.msra.mxu0 %v158
    %178 = vmatpush.msra.mxu0 %v157
    %179 = vmatpush.msra.mxu0 %v156
    %180 = vmatpush.msra.mxu0 %v155
    %181 = vmatpush.msra.mxu0 %v154
    %182 = vmatpush.msra.mxu0 %v153
    %183 = vmatpush.msra.mxu0 %v152
    %184 = vmatpush.msra.mxu0 %v151
    %185 = vmatpush.msra.mxu0 %v150
    %186 = vmatmul.f32.gmra.mxu0 %v149
    %v187 = vpop.f32.mrf.mxu0
    %v188 = vadd.f32 %v168, %v187
    %189 = vdwg.mxu0
    %v190 = vmax.f32 %v188, 0.0
    %v191 = vld [vmem:[%s7] sm:$0xff]
    %v192 = vld [vmem:[%s7 + $0x8] sm:$0xff]
    %v193 = vld [vmem:[%s7 + $0x10] sm:$0xff]
    %v194 = vld [vmem:[%s7 + $0x18] sm:$0xff]
    %v195 = vld [vmem:[%s7 + $0x20] sm:$0xff]
    %v196 = vld [vmem:[%s7 + $0x28] sm:$0xff]
    %v197 = vld [vmem:[%s7 + $0x30] sm:$0xff]
    %v198 = vld [vmem:[%s7 + $0x38] sm:$0xff]
    %v199 = vld [vmem:[%s7 + $0x40] sm:$0xff]
    %v200 = vld [vmem:[%s7 + $0x48] sm:$0xff]
    %v201 = vld [vmem:[%s7 + $0x50] sm:$0xff]
    %v202 = vld [vmem:[%s7 + $0x58] sm:$0xff]
    %v203 = vld [vmem:[%s7 + $0x60] sm:$0xff]
    %v204 = vld [vmem:[%s7 + $0x68] sm:$0xff]
    %v205 = vld [vmem:[%s7 + $0x70] sm:$0xff]
    %v206 = vld [vmem:[%s7 + $0x78] sm:$0xff]
    %v207 = vld [vmem:[#allocation7] sm:$0x1]
    %v209 = vperm.slane %v207, 0
    %211 = vmatpush.msra.mxu0 %v206
    %212 = vmatpush.msra.mxu0 %v205
    %213 = vmatpush.msra.mxu0 %v204
    %214 = vmatpush.msra.mxu0 %v203
    %215 = vmatpush.msra.mxu0 %v202
    %216 = vmatpush.msra.mxu0 %v201
    %217 = vmatpush.msra.mxu0 %v200
    %218 = vmatpush.msra.mxu0 %v199
    %219 = vmatpush.msra.mxu0 %v198
    %220 = vmatpush.msra.mxu0 %v197
    %221 = vmatpush.msra.mxu0 %v196
    %222 = vmatpush.msra.mxu0 %v195
    %223 = vmatpush.msra.mxu0 %v194
    %224 = vmatpush.msra.mxu0 %v193
    %225 = vmatpush.msra.mxu0 %v192
    %226 = vmatpush.msra.mxu0 %v191
    %227 = vmatmul.f32.gmra.mxu0 %v190
    %v228 = vpop.f32.mrf.mxu0
    %v229 = vadd.f32 %v209, %v228
    %230 = vdwg.mxu0
    %vm231 = vcmask 15360
    %232 = vst.msk [vmem:[%s9] sm:$0xff] %vm231, %v229
    // Predicated region
    $region54: #{critic_forward.1} parent=1 // pred_check
      _
    $region55: #{critic_forward.1} parent=1 // pred_check_branch
      %234 = sbr.rel (0) target = $region57
    $region56: #{critic_forward.1} parent=1 // pred_region
      _
    $region57: #{critic_forward.1} parent=1 // pred_fallthru
      _
    // Predicated region
    $region58: #{critic_forward.1} parent=1 // pred_check
      _
    $region59: #{critic_forward.1} parent=1 // pred_check_branch
      %236 = sbr.rel (0) target = $region61
    $region60: #{critic_forward.1} parent=1 // pred_region
      _
    $region61: #{critic_forward.1} parent=1 // pred_fallthru
      _
    %237 = vsyncpa [#allocation3], 1
    %238 = vsyncpa [#allocation5], 1
    %239 = vsyncpa [#allocation8], 1

</llo_original>
